<compile_context>
chip_gen: v7x
topology: tpu7x:2x2x1
jax: 0.10.0
libtpu: 0.0.40
codegen_flags: <defaults>
</compile_context>

<pallas_src>
import jax
import jax.numpy as jnp
from jax.experimental import pallas as pl
from jax.experimental.pallas import tpu as pltpu


def gcn3_kernel(a_ref, x_ref, w_ref, v_ref, out_ref):
    """One graph per grid step.

    a_ref  : [N, N]    bf16  normalized adjacency A_hat
    x_ref  : [N, 2s]   f32   node features
    w_ref  : [2s, 3s]  bf16  packed [ W1 | W2 ]  (stored as [F_in, F_out])
    v_ref  : [4, 2s]   f32   row0 = b1, row1 = [b2, 0], row2 = [w3_row, 0],
                             row3 = [b3, 0...]
    out_ref: [N, 1]    f32   per-node scalar output
    """
    f_in = x_ref.shape[-1]          # 2 * size_in
    s = f_in // 2

    a = a_ref[...]                               # bf16 MXU operand
    x = x_ref[...].astype(jnp.bfloat16)

    # static slices of the packed parameter slabs
    w1 = w_ref[:, 0:f_in]                        # [2s, 2s] bf16
    w2 = w_ref[:, f_in:f_in + s]                 # [2s, s]  bf16
    b1 = v_ref[0:1, :]                           # [1, 2s]  f32
    b2 = v_ref[1:2, 0:s]                         # [1, s]   f32
    w3 = v_ref[2:3, 0:s]                         # [1, s]   f32
    b3 = v_ref[3:4, 0:1]                         # [1, 1]   f32

    # layer 1: tanh( A_hat @ (X W1) + b1 )
    # bf16 MXU operands, f32 accumulation; bias + tanh in f32 (VPU/EUP).
    h = jnp.dot(x, w1, preferred_element_type=jnp.float32)
    h = jnp.dot(a, h.astype(jnp.bfloat16), preferred_element_type=jnp.float32) + b1
    h = jnp.tanh(h)

    # layer 2: tanh( A_hat @ (H W2) + b2 )
    h = jnp.dot(h.astype(jnp.bfloat16), w2, preferred_element_type=jnp.float32)
    h = jnp.dot(a, h.astype(jnp.bfloat16), preferred_element_type=jnp.float32) + b2
    h = jnp.tanh(h)

    # layer 3: A_hat @ (H W3) + b3 == (A_hat @ H) @ W3 + b3.
    # Keep the s-lane width through the MXU pass (A_hat @ H); do the final
    # s -> 1 projection as a VPU multiply + lane reduction instead of two
    # 1-lane-wide MXU matmuls.
    ah = jnp.dot(a, h.astype(jnp.bfloat16), preferred_element_type=jnp.float32)  # [N, s]
    out = jnp.sum(ah * w3, axis=-1, keepdims=True) + b3                           # [N, 1]

    out_ref[...] = out.astype(out_ref.dtype)


def gcn_normalize(edge_index, num_nodes):
    """Dense normalized adjacency A_hat = D^{-1/2} (A + I) D^{-1/2}.

    Duplicate edges are summed and the self-loop weight is forced to 1,
    matching PyG's gcn_norm(add_self_loops=True) for unit edge weights.
    """
    src, dst = edge_index[0], edge_index[1]
    # message flows source -> target, so aggregation matrix is A[target, source]
    a = jnp.zeros((num_nodes, num_nodes), jnp.float32).at[dst, src].add(1.0)
    eye = jnp.eye(num_nodes, dtype=jnp.float32)
    a = a * (1.0 - eye) + eye                       # self-loop weight exactly 1
    deg = jnp.sum(a, axis=1)
    dinv = jnp.where(deg > 0.0, jax.lax.rsqrt(deg), 0.0)
    return dinv[:, None] * a * dinv[None, :]


def attention_h_forward(x, a_hat, params):
    """Fused 3-layer GCN forward.

    x:     [G, N, 2*size_in] or [N, 2*size_in] float32 node features
    a_hat: [G, N, N]         or [N, N]         float32 normalized adjacency
    """
    squeeze = x.ndim == 2
    if squeeze:
        x = x[None]
        a_hat = a_hat[None]
    g, n, f_in = x.shape
    s = f_in // 2

    w1, b1, w2, b2, w3, b3 = params
    # Pack parameters into two slabs (4 input DMAs per step instead of 8):
    #   weight slab (bf16, MXU) and vector slab (f32, VPU).
    w_packed = jnp.concatenate([w1, w2], axis=1).astype(jnp.bfloat16)   # [2s, 3s]
    v_packed = jnp.zeros((4, f_in), jnp.float32)
    v_packed = v_packed.at[0, :].set(b1.reshape(-1))
    v_packed = v_packed.at[1, :s].set(b2.reshape(-1))
    v_packed = v_packed.at[2, :s].set(w3.reshape(-1))
    v_packed = v_packed.at[3, 0].set(b3.reshape(-1)[0])

    # bf16 A_hat: halves HBM traffic / VMEM footprint of the dominant operand.
    a_bf16 = a_hat.astype(jnp.bfloat16)

    grid_spec = pltpu.PrefetchScalarGridSpec(
        num_scalar_prefetch=0,
        grid=(g,),
        in_specs=[
            pl.BlockSpec((None, n, n), lambda i: (i, 0, 0)),       # A_hat[g]
            pl.BlockSpec((None, n, f_in), lambda i: (i, 0, 0)),    # X[g]
            pl.BlockSpec((f_in, f_in + s), lambda i: (0, 0)),      # [W1|W2] (resident)
            pl.BlockSpec((4, f_in), lambda i: (0, 0)),             # b1/b2/w3/b3 (resident)
        ],
        # (N, 1) matches the module's per-node scalar output; the final MXU
        # pass is already lane-dense (width s) since the 1-wide projection
        # moved to the VPU.
        out_specs=pl.BlockSpec((None, n, 1), lambda i: (i, 0, 0)),
    )

    out = pl.pallas_call(
        gcn3_kernel,
        out_shape=jax.ShapeDtypeStruct((g, n, 1), jnp.float32),
        grid_spec=grid_spec,
        compiler_params=pltpu.CompilerParams(
            # batch axis is independent -> megacore split on v7x (no-op on v5e/v6e)
            dimension_semantics=("parallel",),
            vmem_limit_bytes=32 * 1024 * 1024,
        ),
    )(a_bf16, x, w_packed, v_packed)

    return out[0] if squeeze else out


def attention_h_reference(x, a_hat, params):
    """Pure-JAX f32 reference (HIGHEST precision) for correctness checking."""
    w1, b1, w2, b2, w3, b3 = params
    hp = jax.lax.Precision.HIGHEST
    h = jnp.matmul(a_hat, jnp.matmul(x, w1, precision=hp), precision=hp) + b1
    h = jnp.tanh(h)
    h = jnp.matmul(a_hat, jnp.matmul(h, w2, precision=hp), precision=hp) + b2
    h = jnp.tanh(h)
    h = jnp.matmul(a_hat, jnp.matmul(h, w3, precision=hp), precision=hp) + b3
    return h


def make_params(key, size_in):
    f_in = 2 * size_in
    k1, k2, k3 = jax.random.split(key, 3)

    def glorot(k, fi, fo):
        scale = jnp.sqrt(6.0 / (fi + fo))
        return jax.random.uniform(k, (fi, fo), jnp.float32, -scale, scale)

    # weights stored as [F_in, F_out]  (== PyG lin.weight.T)
    w1 = glorot(k1, f_in, f_in)
    b1 = jnp.zeros((1, f_in), jnp.float32)
    w2 = glorot(k2, f_in, size_in)
    b2 = jnp.zeros((1, size_in), jnp.float32)
    w3 = glorot(k3, size_in, 1)
    b3 = jnp.zeros((1, 1), jnp.float32)
    return (w1, b1, w2, b2, w3, b3)


if __name__ == "__main__":
    size_in = 8          # module "size_in"; input feature dim is 2*size_in
    num_nodes = 16
    num_graphs = 4       # small batch of graphs to exercise the parallel grid axis

    key = jax.random.PRNGKey(0)
    kx, kp = jax.random.split(key)

    # node features: [G, N, 2*size_in]
    x_b = jax.random.normal(kx, (num_graphs, num_nodes, 2 * size_in), jnp.float32)

    # deterministic edge_index per graph: directed ring + skip-k edges (k varies)
    i = jnp.arange(num_nodes)
    a_hats = []
    for g in range(num_graphs):
        k = 2 + g
        src = jnp.concatenate([i, (i + 1) % num_nodes, i, (i + k) % num_nodes])
        dst = jnp.concatenate([(i + 1) % num_nodes, i, (i + k) % num_nodes, i])
        edge_index = jnp.stack([src, dst], axis=0)
        a_hats.append(gcn_normalize(edge_index, num_nodes))
    a_hat_b = jnp.stack(a_hats, axis=0)

    params = make_params(kp, size_in)

    out = attention_h_forward(x_b, a_hat_b, params)
    out = jax.block_until_ready(out)
    assert out.shape == (num_graphs, num_nodes, 1), out.shape

    # loose tolerance: kernel uses bf16 MXU operands with f32 accumulation
    ref = attention_h_reference(x_b, a_hat_b, params)
    assert bool(jnp.all(jnp.isfinite(out)))
    assert bool(jnp.allclose(out, ref, atol=0.25, rtol=0.25)), \
        float(jnp.max(jnp.abs(out - ref)))

    print("KERNEL_OK")
</pallas_src>

<mosaic_0001>
module attributes {stable_mosaic.version = 11 : i64} {
  func.func @gcn3_kernel(%arg0: i32, %arg1: memref<1x16x16xbf16, #tpu.memory_space<vmem>>, %arg2: memref<1x16x16xf32, #tpu.memory_space<vmem>>, %arg3: memref<16x24xbf16, #tpu.memory_space<vmem>>, %arg4: memref<4x16xf32, #tpu.memory_space<vmem>>, %arg5: memref<1x16x1xf32, #tpu.memory_space<vmem>>) attributes {dimension_semantics = [#tpu.dimension_semantics<parallel>], iteration_bounds = array<i64: 4>, scalar_prefetch = 0 : i64, scratch_operands = 0 : i64, tpu.core_type = #tpu.core_type<tc>, window_params = [{transform_indices = @transform_0, window_bounds = array<i64: 1, 16, 16>}, {transform_indices = @transform_1, window_bounds = array<i64: 1, 16, 16>}, {pipeline_mode = #tpu.pipeline_mode<synchronous>, transform_indices = @transform_2, window_bounds = array<i64: 16, 24>}, {pipeline_mode = #tpu.pipeline_mode<synchronous>, transform_indices = @transform_3, window_bounds = array<i64: 4, 16>}, {transform_indices = @transform_4, window_bounds = array<i64: 1, 16, 1>}]} {
    %c0 = arith.constant 0 : index
    %c0_0 = arith.constant 0 : index
    %c0_1 = arith.constant 0 : index
    %0 = vector.load %arg1[%c0, %c0_0, %c0_1] : memref<1x16x16xbf16, #tpu.memory_space<vmem>>, vector<1x16x16xbf16>
    %1 = vector.shape_cast %0 : vector<1x16x16xbf16> to vector<16x16xbf16>
    %c0_2 = arith.constant 0 : index
    %c0_3 = arith.constant 0 : index
    %c0_4 = arith.constant 0 : index
    %2 = vector.load %arg2[%c0_2, %c0_3, %c0_4] : memref<1x16x16xf32, #tpu.memory_space<vmem>>, vector<1x16x16xf32>
    %3 = vector.shape_cast %2 : vector<1x16x16xf32> to vector<16x16xf32>
    %4 = arith.truncf %3 : vector<16x16xf32> to vector<16x16xbf16>
    %c0_5 = arith.constant 0 : index
    %c0_6 = arith.constant 0 : index
    %5 = vector.load %arg3[%c0_5, %c0_6] : memref<16x24xbf16, #tpu.memory_space<vmem>>, vector<16x16xbf16>
    %c0_7 = arith.constant 0 : index
    %c16 = arith.constant 16 : index
    %6 = vector.load %arg3[%c0_7, %c16] : memref<16x24xbf16, #tpu.memory_space<vmem>>, vector<16x8xbf16>
    %c0_8 = arith.constant 0 : index
    %c0_9 = arith.constant 0 : index
    %7 = vector.load %arg4[%c0_8, %c0_9] : memref<4x16xf32, #tpu.memory_space<vmem>>, vector<1x16xf32>
    %c1 = arith.constant 1 : index
    %c0_10 = arith.constant 0 : index
    %8 = vector.load %arg4[%c1, %c0_10] : memref<4x16xf32, #tpu.memory_space<vmem>>, vector<1x8xf32>
    %c2 = arith.constant 2 : index
    %c0_11 = arith.constant 0 : index
    %9 = vector.load %arg4[%c2, %c0_11] : memref<4x16xf32, #tpu.memory_space<vmem>>, vector<1x8xf32>
    %c3 = arith.constant 3 : index
    %c0_12 = arith.constant 0 : index
    %10 = vector.load %arg4[%c3, %c0_12] : memref<4x16xf32, #tpu.memory_space<vmem>>, vector<1x1xf32>
    %cst = arith.constant dense<0.000000e+00> : vector<16x16xf32>
    %11 = tpu.matmul %4, %5, %cst {dimension_numbers = #tpu.dot_dimension_numbers<[1], [0], [0], [1], [0, 0, 1, 1], [], []>} : vector<16x16xbf16>, vector<16x16xbf16>, vector<16x16xf32> -> vector<16x16xf32>
    %12 = arith.truncf %11 : vector<16x16xf32> to vector<16x16xbf16>
    %cst_13 = arith.constant dense<0.000000e+00> : vector<16x16xf32>
    %13 = tpu.matmul %1, %12, %cst_13 {dimension_numbers = #tpu.dot_dimension_numbers<[1], [0], [0], [1], [0, 0, 1, 1], [], []>} : vector<16x16xbf16>, vector<16x16xbf16>, vector<16x16xf32> -> vector<16x16xf32>
    %14 = vector.broadcast %7 : vector<1x16xf32> to vector<16x16xf32>
    %15 = arith.addf %13, %14 : vector<16x16xf32>
    %16 = math.tanh %15 : vector<16x16xf32>
    %17 = arith.truncf %16 : vector<16x16xf32> to vector<16x16xbf16>
    %cst_14 = arith.constant dense<0.000000e+00> : vector<16x8xf32>
    %18 = tpu.matmul %17, %6, %cst_14 {dimension_numbers = #tpu.dot_dimension_numbers<[1], [0], [0], [1], [0, 0, 1, 1], [], []>} : vector<16x16xbf16>, vector<16x8xbf16>, vector<16x8xf32> -> vector<16x8xf32>
    %19 = arith.truncf %18 : vector<16x8xf32> to vector<16x8xbf16>
    %cst_15 = arith.constant dense<0.000000e+00> : vector<16x8xf32>
    %20 = tpu.matmul %1, %19, %cst_15 {dimension_numbers = #tpu.dot_dimension_numbers<[1], [0], [0], [1], [0, 0, 1, 1], [], []>} : vector<16x16xbf16>, vector<16x8xbf16>, vector<16x8xf32> -> vector<16x8xf32>
    %21 = vector.broadcast %8 : vector<1x8xf32> to vector<16x8xf32>
    %22 = arith.addf %20, %21 : vector<16x8xf32>
    %23 = math.tanh %22 : vector<16x8xf32>
    %24 = arith.truncf %23 : vector<16x8xf32> to vector<16x8xbf16>
    %cst_16 = arith.constant dense<0.000000e+00> : vector<16x8xf32>
    %25 = tpu.matmul %1, %24, %cst_16 {dimension_numbers = #tpu.dot_dimension_numbers<[1], [0], [0], [1], [0, 0, 1, 1], [], []>} : vector<16x16xbf16>, vector<16x8xbf16>, vector<16x8xf32> -> vector<16x8xf32>
    %26 = vector.broadcast %9 : vector<1x8xf32> to vector<16x8xf32>
    %27 = arith.mulf %25, %26 : vector<16x8xf32>
    %cst_17 = arith.constant dense<0.000000e+00> : vector<16xf32>
    %28 = vector.multi_reduction <add>, %27, %cst_17 [1] : vector<16x8xf32> to vector<16xf32>
    %29 = vector.shape_cast %28 : vector<16xf32> to vector<16x1xf32>
    %30 = vector.broadcast %10 : vector<1x1xf32> to vector<16x1xf32>
    %31 = arith.addf %29, %30 : vector<16x1xf32>
    %c0_18 = arith.constant 0 : index
    %c0_19 = arith.constant 0 : index
    %c0_20 = arith.constant 0 : index
    %32 = vector.load %arg5[%c0_18, %c0_19, %c0_20] : memref<1x16x1xf32, #tpu.memory_space<vmem>>, vector<1x16x1xf32>
    %33 = vector.shape_cast %32 : vector<1x16x1xf32> to vector<16x1xf32>
    %34 = vector.shape_cast %31 : vector<16x1xf32> to vector<1x16x1xf32>
    tpu.vector_store %arg5[%c0_18, %c0_19, %c0_20], %34 {strides = array<i32>} : memref<1x16x1xf32, #tpu.memory_space<vmem>>, vector<1x16x1xf32>,
    return
  }
  func.func @transform_0(%arg0: i32) -> (i32, i32, i32) {
    %c0_i32 = arith.constant 0 : i32
    %c0_i32_0 = arith.constant 0 : i32
    %c0_i32_1 = arith.constant 0 : i32
    return %arg0, %c0_i32, %c0_i32_0 : i32, i32, i32
  }
  func.func @transform_1(%arg0: i32) -> (i32, i32, i32) {
    %c0_i32 = arith.constant 0 : i32
    %c0_i32_0 = arith.constant 0 : i32
    %c0_i32_1 = arith.constant 0 : i32
    return %arg0, %c0_i32, %c0_i32_0 : i32, i32, i32
  }
  func.func @transform_2(%arg0: i32) -> (i32, i32) {
    %c0_i32 = arith.constant 0 : i32
    %c0_i32_0 = arith.constant 0 : i32
    %c0_i32_1 = arith.constant 0 : i32
    return %c0_i32, %c0_i32_0 : i32, i32
  }
  func.func @transform_3(%arg0: i32) -> (i32, i32) {
    %c0_i32 = arith.constant 0 : i32
    %c0_i32_0 = arith.constant 0 : i32
    %c0_i32_1 = arith.constant 0 : i32
    return %c0_i32, %c0_i32_0 : i32, i32
  }
  func.func @transform_4(%arg0: i32) -> (i32, i32, i32) {
    %c0_i32 = arith.constant 0 : i32
    %c0_i32_0 = arith.constant 0 : i32
    %c0_i32_1 = arith.constant 0 : i32
    return %arg0, %c0_i32, %c0_i32_0 : i32, i32, i32
  }
}

</mosaic_0001>

<llo_original>
// kernel: tpu_custom_call.1
$region0: #{tpu_custom_call.1}
  #allocation0 [shape = 'u32[]', space=smem, size = 0x4, offset = 0x4, fixed_abs, tag = 'smem constant byte address 0x4 - core index']
  #allocation1 [shape = 'u32[144,128]{1,0:T(1,128)}', space=vmem, size = 0x12000, scoped, tag = 'internal scratch']
  %s0 = inlined_call_operand.hbm [shape: bf16[4,16,16], index: 0, kind: input, shape index: {}]
  %s1 = inlined_call_operand.hbm [shape: f32[4,16,16], index: 1, kind: input, shape index: {}]
  %s2 = inlined_call_operand.hbm [shape: bf16[16,24], index: 2, kind: input, shape index: {}]
  %s3 = inlined_call_operand.vmem [shape: f32[4,16], index: 3, kind: input, shape index: {}]
  %s4 = inlined_call_operand.vmem [shape: f32[4,16,1], index: 4, kind: output, shape index: {}]
  %s5 = sld [smem:[#allocation0]]
  $region61: #{tpu_custom_call.1} parent=0
    _
  %s7 = ssub.s32 1, %s5
  %s8 = scalar_select 0, %s7, %s5
  $region1: #{tpu_custom_call.1} parent=0
    #allocation2 [shape = 'u8[8192]{0}', space=vmem, size = 0x2000, scoped, tag = 'input window, operand 0']
    #allocation3 [shape = 's32[2]{0}', space=sflag, size = 0x8, scoped, tag = 'scoped memory for tpu_custom_call.1']
    #allocation4 [shape = 'u8[16384]{0}', space=vmem, size = 0x4000, scoped, tag = 'input window, operand 1']
    #allocation5 [shape = 's32[2]{0}', space=sflag, size = 0x8, scoped, tag = 'scoped memory for tpu_custom_call.1']
    #allocation6 [shape = 'u8[4096]{0}', space=vmem, size = 0x1000, scoped, tag = 'input window, operand 2, single buffered']
    %9 = vsyncpa [#allocation3], 0
    %s10 = scalar_lea.sflag [#allocation3], 1
    %11 = vsyncpa %s10, 0
    %12 = vsyncpa [#allocation5], 0
    %s13 = scalar_lea.sflag [#allocation5], 1
    %14 = vsyncpa %s13, 0
    loop: start=0, step=1, limit=6
    $region2: #{tpu_custom_call.1} parent=1 // loop_pre_header
      _
    $region3: #{tpu_custom_call.1} parent=1 // loop_header
      %s16 = sphi 0, %s20
      %p17 = scmp.ge.s32.totalorder %s16, 6
      %s26 = sphi 0, %s28
      %s29 = sphi 0, %s26
      %s30 = sphi 0, %s29
      %s46 = sphi 0, %s30
      %s52 = sphi 0, %s54
      %s55 = sphi 0, %s52
      %s56 = sphi 0, %s55
      %s72 = sphi 0, %s56
      %s76 = sphi 0, %s76
      %s78 = sphi 0, %s76
      %s79 = sphi 0, %s78
      %s93 = sphi 0, %s79
      %s97 = sphi 0, %s97
      %s99 = sphi 0, %s97
      %s100 = sphi 0, %s99
      %s114 = sphi 0, %s100
      %s120 = sphi 0, %s122
      %s123 = sphi 0, %s120
      %s124 = sphi 0, %s123
      %s140 = sphi 0, %s124
    $region4: #{tpu_custom_call.1} parent=1 // loop_header_branch
      %19 = sbr.rel (%p17) target = $region8
    $region5: #{tpu_custom_call.1} parent=1 // loop_body
      %s21 = ssub.s32 %s16, 1
      %s22 = ssub.s32 %s16, 2
      %s23 = sadd.s32 %s16, 1
      %s24 = ssub.s32 %s16, %s23
      %p25 = scmp.eq.s32.totalorder %s24, 0
      %s27 = sadd.s32 %s26, 1
      %s28 = scalar_select %p25, %s26, %s27
      %p31 = pneg %p25
      %p32 = scmp.eq.s32.totalorder %s16, 3
      %p33 = por %p31, %p32
      %p34 = scmp.ne.s32.totalorder %s26, %s29
      %p35 = scmp.eq.s32.totalorder %s16, 0
      %p36 = por %p34, %p35
      %p37 = scmp.ne.s32.totalorder %s26, %s29
      %p38 = scmp.eq.s32.totalorder %s21, 3
      %p39 = por %p37, %p38
      %p40 = scmp.ne.s32.totalorder %s29, %s30
      %p41 = scmp.eq.s32.totalorder %s21, 0
      %p42 = por %p40, %p41
      %p43 = scmp.ne.s32.totalorder %s29, %s30
      %p44 = scmp.eq.s32.totalorder %s22, 3
      %p45 = por %p43, %p44
      %p47 = scmp.ne.s32.totalorder %s30, %s46
      %p48 = scmp.eq.s32.totalorder %s22, 0
      %p49 = por %p47, %p48
      %s50 = ssub.s32 %s16, %s23
      %p51 = scmp.eq.s32.totalorder %s50, 0
      %s53 = sadd.s32 %s52, 1
      %s54 = scalar_select %p51, %s52, %s53
      %p57 = pneg %p51
      %p58 = scmp.eq.s32.totalorder %s16, 3
      %p59 = por %p57, %p58
      %p60 = scmp.ne.s32.totalorder %s52, %s55
      %p61 = scmp.eq.s32.totalorder %s16, 0
      %p62 = por %p60, %p61
      %p63 = scmp.ne.s32.totalorder %s52, %s55
      %p64 = scmp.eq.s32.totalorder %s21, 3
      %p65 = por %p63, %p64
      %p66 = scmp.ne.s32.totalorder %s55, %s56
      %p67 = scmp.eq.s32.totalorder %s21, 0
      %p68 = por %p66, %p67
      %p69 = scmp.ne.s32.totalorder %s55, %s56
      %p70 = scmp.eq.s32.totalorder %s22, 3
      %p71 = por %p69, %p70
      %p73 = scmp.ne.s32.totalorder %s56, %s72
      %p74 = scmp.eq.s32.totalorder %s22, 0
      %p75 = por %p73, %p74
      %s77 = sadd.s32 %s76, 1
      %p80 = scmp.eq.s32.totalorder %s16, 3
      %p81 = scmp.ne.s32.totalorder %s76, %s78
      %p82 = scmp.eq.s32.totalorder %s16, 0
      %p83 = por %p81, %p82
      %p84 = scmp.ne.s32.totalorder %s76, %s78
      %p85 = scmp.eq.s32.totalorder %s21, 3
      %p86 = por %p84, %p85
      %p87 = scmp.ne.s32.totalorder %s78, %s79
      %p88 = scmp.eq.s32.totalorder %s21, 0
      %p89 = por %p87, %p88
      %p90 = scmp.ne.s32.totalorder %s78, %s79
      %p91 = scmp.eq.s32.totalorder %s22, 3
      %p92 = por %p90, %p91
      %p94 = scmp.ne.s32.totalorder %s79, %s93
      %p95 = scmp.eq.s32.totalorder %s22, 0
      %p96 = por %p94, %p95
      %s98 = sadd.s32 %s97, 1
      %p101 = scmp.eq.s32.totalorder %s16, 3
      %p102 = scmp.ne.s32.totalorder %s97, %s99
      %p103 = scmp.eq.s32.totalorder %s16, 0
      %p104 = por %p102, %p103
      %p105 = scmp.ne.s32.totalorder %s97, %s99
      %p106 = scmp.eq.s32.totalorder %s21, 3
      %p107 = por %p105, %p106
      %p108 = scmp.ne.s32.totalorder %s99, %s100
      %p109 = scmp.eq.s32.totalorder %s21, 0
      %p110 = por %p108, %p109
      %p111 = scmp.ne.s32.totalorder %s99, %s100
      %p112 = scmp.eq.s32.totalorder %s22, 3
      %p113 = por %p111, %p112
      %p115 = scmp.ne.s32.totalorder %s100, %s114
      %p116 = scmp.eq.s32.totalorder %s22, 0
      %p117 = por %p115, %p116
      %s118 = ssub.s32 %s16, %s23
      %p119 = scmp.eq.s32.totalorder %s118, 0
      %s121 = sadd.s32 %s120, 1
      %s122 = scalar_select %p119, %s120, %s121
      %p125 = pneg %p119
      %p126 = scmp.eq.s32.totalorder %s16, 3
      %p127 = por %p125, %p126
      %p128 = scmp.ne.s32.totalorder %s120, %s123
      %p129 = scmp.eq.s32.totalorder %s16, 0
      %p130 = por %p128, %p129
      %p131 = scmp.ne.s32.totalorder %s120, %s123
      %p132 = scmp.eq.s32.totalorder %s21, 3
      %p133 = por %p131, %p132
      %p134 = scmp.ne.s32.totalorder %s123, %s124
      %p135 = scmp.eq.s32.totalorder %s21, 0
      %p136 = por %p134, %p135
      %p137 = scmp.ne.s32.totalorder %s123, %s124
      %p138 = scmp.eq.s32.totalorder %s22, 3
      %p139 = por %p137, %p138
      %p141 = scmp.ne.s32.totalorder %s124, %s140
      %p142 = scmp.eq.s32.totalorder %s22, 0
      %p143 = por %p141, %p142
      %p144 = scmp.le.s32.totalorder 1, %s16
      %p145 = scmp.lt.s32.totalorder %s16, 5
      %p146 = pnand %p144, %p145
      %p147 = pneg %p146
      // Predicated region
      $region9: #{tpu_custom_call.1} parent=5 // pred_check
        _
      $region10: #{tpu_custom_call.1} parent=5 // pred_check_branch
        %149 = sbr.rel (%p146) target = $region12
      $region11: #{tpu_custom_call.1} parent=5 // pred_region
        %s150 = ssub.s32 %s16, 1
        // Predicated region
        $region13: #{tpu_custom_call.1} parent=11 // pred_check
          %p151 = pneg %p89
        $region14: #{tpu_custom_call.1} parent=11 // pred_check_branch
          %153 = sbr.rel (%p151) target = $region16
        $region15: #{tpu_custom_call.1} parent=11 // pred_region
          %s155 = ssub.s32 128, 128
          %156 = vsyncadd [#allocation5], %s155
          %s157 = sshll.u32 [#allocation6], 4
          %s158 = int_to_ptr.vmem [resolvable:$true] %s157
          %163 = dma.hbm_to_vmem [thread:$0]  %s2, 128, %s158, [#allocation5], 64, 64, 4
        $region16: #{tpu_custom_call.1} parent=11 // pred_fallthru
          _
        // Predicated region
        $region17: #{tpu_custom_call.1} parent=11 // pred_check
          %p164 = pneg %p110
        $region18: #{tpu_custom_call.1} parent=11 // pred_check_branch
          %166 = sbr.rel (%p164) target = $region20
        $region19: #{tpu_custom_call.1} parent=11 // pred_region
          _
        $region20: #{tpu_custom_call.1} parent=11 // pred_fallthru
          _
      $region12: #{tpu_custom_call.1} parent=5 // pred_fallthru
        _
      %p167 = scmp.lt.s32.totalorder %s16, 4
      // Predicated region
      $region21: #{tpu_custom_call.1} parent=5 // pred_check
        %p168 = pneg %p167
      $region22: #{tpu_custom_call.1} parent=5 // pred_check_branch
        %170 = sbr.rel (%p168) target = $region24
      $region23: #{tpu_custom_call.1} parent=5 // pred_region
        // Predicated region
        $region25: #{tpu_custom_call.1} parent=23 // pred_check
          %p171 = pneg %p36
        $region26: #{tpu_custom_call.1} parent=23 // pred_check_branch
          %173 = sbr.rel (%p171) target = $region28
        $region27: #{tpu_custom_call.1} parent=23 // pred_region
          %s174 = sand.u32 %s26, 1
          %s175 = scalar_lea.sflag [#allocation3], %s174
          %s176 = sand.u32 %s26, 1
          %s177 = smul.addr %s176, 8
          %s178 = scalar_lea.vmem [#allocation2], %s177
          %s180 = ssub.s32 128, 128
          %181 = vsyncadd %s175, %s180
          %s182 = smul.addr %s16, 2
          %s183 = smul.addr %s182, 64
          %s184 = scalar_lea.hbm %s0, %s183
          %s185 = sshll.u32 %s178, 4
          %s186 = int_to_ptr.vmem [resolvable:$true] %s185
          %191 = dma.hbm_to_vmem [thread:$0]  %s184, 128, %s186, %s175, 64, 64, 4
        $region28: #{tpu_custom_call.1} parent=23 // pred_fallthru
          _
        // Predicated region
        $region29: #{tpu_custom_call.1} parent=23 // pred_check
          %p192 = pneg %p62
        $region30: #{tpu_custom_call.1} parent=23 // pred_check_branch
          %194 = sbr.rel (%p192) target = $region32
        $region31: #{tpu_custom_call.1} parent=23 // pred_region
          %s195 = sand.u32 %s16, 1
          %s196 = scalar_lea.sflag [#allocation5], %s195
          %s197 = sand.u32 %s52, 1
          %s198 = smul.addr %s197, 16
          %s199 = scalar_lea.vmem [#allocation4], %s198
          %s201 = ssub.s32 256, 256
          %202 = vsyncadd %s196, %s201
          %s203 = smul.addr %s16, 2
          %s204 = smul.addr %s203, 128
          %s205 = scalar_lea.hbm %s1, %s204
          %s206 = sshll.u32 %s199, 4
          %s207 = int_to_ptr.vmem [resolvable:$true] %s206
          %212 = dma.hbm_to_vmem [thread:$0]  %s205, 256, %s207, %s196, 128, 128, 8
        $region32: #{tpu_custom_call.1} parent=23 // pred_fallthru
          _
      $region24: #{tpu_custom_call.1} parent=5 // pred_fallthru
        _
      %p213 = scmp.le.s32.totalorder 1, %s16
      %p214 = scmp.lt.s32.totalorder %s16, 5
      %p215 = pnand %p213, %p214
      %p216 = pneg %p215
      // Predicated region
      $region33: #{tpu_custom_call.1} parent=5 // pred_check
        _
      $region34: #{tpu_custom_call.1} parent=5 // pred_check_branch
        %218 = sbr.rel (%p215) target = $region36
      $region35: #{tpu_custom_call.1} parent=5 // pred_region
        %s219 = ssub.s32 %s16, 1
        %s220 = sand.u32 %s29, 1
        %s221 = scalar_lea.sflag [#allocation3], %s220
        %s222 = sand.u32 %s29, 1
        %s223 = smul.addr %s222, 8
        %s224 = scalar_lea.vmem [#allocation2], %s223
        // Predicated region
        $region37: #{tpu_custom_call.1} parent=35 // pred_check
          %p225 = pneg %p42
        $region38: #{tpu_custom_call.1} parent=35 // pred_check_branch
          %227 = sbr.rel (%p225) target = $region40
        $region39: #{tpu_custom_call.1} parent=35 // pred_region
          %228 = dma.done %s221, 128
        $region40: #{tpu_custom_call.1} parent=35 // pred_fallthru
          _
        %s229 = sand.u32 %s21, 1
        %s230 = scalar_lea.sflag [#allocation5], %s229
        %s231 = sand.u32 %s55, 1
        %s232 = smul.addr %s231, 16
        %s233 = scalar_lea.vmem [#allocation4], %s232
        // Predicated region
        $region41: #{tpu_custom_call.1} parent=35 // pred_check
          %p234 = pneg %p68
        $region42: #{tpu_custom_call.1} parent=35 // pred_check_branch
          %236 = sbr.rel (%p234) target = $region44
        $region43: #{tpu_custom_call.1} parent=35 // pred_region
          %237 = dma.done %s230, 256
        $region44: #{tpu_custom_call.1} parent=35 // pred_fallthru
          _
        // Predicated region
        $region45: #{tpu_custom_call.1} parent=35 // pred_check
          %p238 = pneg %p89
        $region46: #{tpu_custom_call.1} parent=35 // pred_check_branch
          %240 = sbr.rel (%p238) target = $region48
        $region47: #{tpu_custom_call.1} parent=35 // pred_region
          %241 = dma.done [#allocation5], 128
        $region48: #{tpu_custom_call.1} parent=35 // pred_fallthru
          _
        %s242 = sand.u32 %s29, 1
        %s243 = scalar_lea.sflag [#allocation3], %s242
        %s244 = sand.u32 %s29, 1
        %s245 = smul.addr %s244, 8
        %s246 = scalar_lea.vmem [#allocation2], %s245
        %p247 = pneg %p42
        %p248 = pneg %p39
        %s249 = sand.u32 %s21, 1
        %s250 = scalar_lea.sflag [#allocation5], %s249
        %s251 = sand.u32 %s55, 1
        %s252 = smul.addr %s251, 16
        %s253 = scalar_lea.vmem [#allocation4], %s252
        %p254 = pneg %p68
        %p255 = pneg %p65
        %p256 = pneg %p89
        %p257 = pneg %p86
        %p258 = pneg %p110
        %p259 = pneg %p107
        %p260 = pneg %p136
        %p261 = pneg %p133
        %p262 = scmp.lt.s32.totalorder %s21, 3
        %s263 = scalar_select %p262, %s21, 3
        %s264 = smul.addr %s263, 2
        %s265 = smul.addr %s264, 8
        %s266 = scalar_lea.vmem %s4, %s265
        %p267 = scmp.lt.s32.totalorder %s21, 3
        %s268 = scalar_select %p267, %s21, 3
        %s269 = smul.addr %s268, 2
        %s270 = smul.addr %s269, 8
        %s271 = scalar_lea.vmem %s4, %s270
        %v273 = vld [vmem:[%s224] sm:$0xf]
        %v274 = vld [vmem:[%s224 + $0x4] sm:$0xf]
        %v275 = vld [vmem:[%s233] sm:$0xff]
        %v276 = vld [vmem:[%s233 + $0x8] sm:$0xff]
        %v277 = vpack.c.bf16 %v276, %v275
        %v278 = vld [vmem:[#allocation6] sm:$0xf]
        %v279 = vld [vmem:[#allocation6 + $0x4] sm:$0xf]
        %v280 = vld [vmem:[%s3] sm:$0x1]
        %v281 = vld [vmem:[%s3 + $0x1] sm:$0x1]
        %v282 = vld [vmem:[%s3 + $0x2] sm:$0x1]
        %v283 = vld [vmem:[%s3 + $0x3] sm:$0x1]
        %v286 = vunpack.c.l.b16 %v278
        %v287 = vunpack.c.l.b16 %v279
        %v288 = vpack.c.b16 %v287, %v286
        %vm290 = vcmask 130048
        %v292 = vsel %vm290, %v277, 0
        %294 = vmatprep.subr.bf16.mxu0 0
        %295 = vmatpush1.bf16.msra.mxu0 %v288
        %296 = vmatprep.subr.bf16.mxu0 0
        %297 = vmatpush1.bf16.msra.mxu0 0
        %298 = vmatprep.subr.bf16.mxu0 0
        %299 = vmatpush1.bf16.msra.mxu0 0
        %300 = vmatprep.subr.bf16.mxu0 0
        %301 = vmatpush1.bf16.msra.mxu0 0
        %302 = vmatprep.subr.bf16.mxu0 0
        %303 = vmatpush1.bf16.msra.mxu0 0
        %304 = vmatprep.subr.bf16.mxu0 0
        %305 = vmatpush1.bf16.msra.mxu0 0
        %306 = vmatprep.subr.bf16.mxu0 0
        %307 = vmatpush1.bf16.msra.mxu0 0
        %308 = vmatprep.subr.bf16.mxu0 0
        %309 = vmatpush1.bf16.msra.mxu0 0
        %310 = vmatprep.subr.bf16.mxu0 0
        %311 = vmatpush1.bf16.msra.mxu0 0
        %312 = vmatprep.subr.bf16.mxu0 0
        %313 = vmatpush1.bf16.msra.mxu0 0
        %314 = vmatprep.subr.bf16.mxu0 0
        %315 = vmatpush1.bf16.msra.mxu0 0
        %316 = vmatprep.subr.bf16.mxu0 0
        %317 = vmatpush1.bf16.msra.mxu0 0
        %318 = vmatprep.subr.bf16.mxu0 0
        %319 = vmatpush1.bf16.msra.mxu0 0
        %320 = vmatprep.subr.bf16.mxu0 0
        %321 = vmatpush1.bf16.msra.mxu0 0
        %322 = vmatprep.subr.bf16.mxu0 0
        %323 = vmatpush1.bf16.msra.mxu0 0
        %324 = vmatprep.subr.bf16.mxu0 0
        %325 = vmatpush1.bf16.msra.mxu0 0
        %326 = vmatprep.mubr.bf16.mxu0 0
        %327 = vmatmul.mubr.bf16.gmra.mrb[0].mxu0 %v292
        %v328 = vpop.f32.mrb[0].mxu0
        %v329 = vadd.f32 0.0, %v328
        %v330 = vpop.f32.mrb[0].mxu0
        %v331 = vpop.f32.mrb[0].mxu0
        %v332 = vadd.f32 0.0, %v331
        %v333 = vpop.f32.mrb[0].mxu0
        %334 = vdwg.mxu0
        %v335 = vpack.c.bf16 %v332, %v329
        %v336 = vlaneseq
        %v337 = vshrl.u32 %v336, 7
        %v338 = vsub.s32 0, %v337
        %v339 = vrot.slane %v280, %v338
        %v342 = vunpack.c.l.b16 %v273
        %v343 = vunpack.c.l.b16 %v274
        %v344 = vpack.c.b16 %v343, %v342
        %v346 = vsel %vm290, %v344, 0
        %348 = vmatprep.subr.bf16.mxu0 0
        %349 = vmatpush1.bf16.msra.mxu0 %v335
        %350 = vmatprep.subr.bf16.mxu0 0
        %351 = vmatpush1.bf16.msra.mxu0 0
        %352 = vmatprep.subr.bf16.mxu0 0
        %353 = vmatpush1.bf16.msra.mxu0 0
        %354 = vmatprep.subr.bf16.mxu0 0
        %355 = vmatpush1.bf16.msra.mxu0 0
        %356 = vmatprep.subr.bf16.mxu0 0
        %357 = vmatpush1.bf16.msra.mxu0 0
        %358 = vmatprep.subr.bf16.mxu0 0
        %359 = vmatpush1.bf16.msra.mxu0 0
        %360 = vmatprep.subr.bf16.mxu0 0
        %361 = vmatpush1.bf16.msra.mxu0 0
        %362 = vmatprep.subr.bf16.mxu0 0
        %363 = vmatpush1.bf16.msra.mxu0 0
        %364 = vmatprep.subr.bf16.mxu0 0
        %365 = vmatpush1.bf16.msra.mxu0 0
        %366 = vmatprep.subr.bf16.mxu0 0
        %367 = vmatpush1.bf16.msra.mxu0 0
        %368 = vmatprep.subr.bf16.mxu0 0
        %369 = vmatpush1.bf16.msra.mxu0 0
        %370 = vmatprep.subr.bf16.mxu0 0
        %371 = vmatpush1.bf16.msra.mxu0 0
        %372 = vmatprep.subr.bf16.mxu0 0
        %373 = vmatpush1.bf16.msra.mxu0 0
        %374 = vmatprep.subr.bf16.mxu0 0
        %375 = vmatpush1.bf16.msra.mxu0 0
        %376 = vmatprep.subr.bf16.mxu0 0
        %377 = vmatpush1.bf16.msra.mxu0 0
        %378 = vmatprep.subr.bf16.mxu0 0
        %379 = vmatpush1.bf16.msra.mxu0 0
        %380 = vmatprep.mubr.bf16.mxu0 0
        %381 = vmatmul.mubr.bf16.gmra.mrb[0].mxu0 %v346
        %v382 = vpop.f32.mrb[0].mxu0
        %v383 = vadd.f32 %v339, %v382
        %v384 = vpop.f32.mrb[0].mxu0
        %v385 = vpop.f32.mrb[0].mxu0
        %v386 = vadd.f32 %v339, %v385
        %v387 = vpop.f32.mrb[0].mxu0
        %388 = vdwg.mxu0
        %v389 = vtanh.pop %v383
        %v390 = vtanh.pop %v386
        %v391 = vpack.c.bf16 %v390, %v389
        %392 = vrot.lane.b32.xlu0 %v288, 112
        %v393 = vpop.permute.xlu0 %392
        %v396 = vsel %vm290, %v391, 0
        %398 = vmatprep.subr.bf16.mxu0 0
        %399 = vmatpush1.bf16.msra.mxu0 %v393
        %400 = vmatprep.subr.bf16.mxu0 0
        %401 = vmatpush1.bf16.msra.mxu0 0
        %402 = vmatprep.subr.bf16.mxu0 0
        %403 = vmatpush1.bf16.msra.mxu0 0
        %404 = vmatprep.subr.bf16.mxu0 0
        %405 = vmatpush1.bf16.msra.mxu0 0
        %406 = vmatprep.subr.bf16.mxu0 0
        %407 = vmatpush1.bf16.msra.mxu0 0
        %408 = vmatprep.subr.bf16.mxu0 0
        %409 = vmatpush1.bf16.msra.mxu0 0
        %410 = vmatprep.subr.bf16.mxu0 0
        %411 = vmatpush1.bf16.msra.mxu0 0
        %412 = vmatprep.subr.bf16.mxu0 0
        %413 = vmatpush1.bf16.msra.mxu0 0
        %414 = vmatprep.subr.bf16.mxu0 0
        %415 = vmatpush1.bf16.msra.mxu0 0
        %416 = vmatprep.subr.bf16.mxu0 0
        %417 = vmatpush1.bf16.msra.mxu0 0
        %418 = vmatprep.subr.bf16.mxu0 0
        %419 = vmatpush1.bf16.msra.mxu0 0
        %420 = vmatprep.subr.bf16.mxu0 0
        %421 = vmatpush1.bf16.msra.mxu0 0
        %422 = vmatprep.subr.bf16.mxu0 0
        %423 = vmatpush1.bf16.msra.mxu0 0
        %424 = vmatprep.subr.bf16.mxu0 0
        %425 = vmatpush1.bf16.msra.mxu0 0
        %426 = vmatprep.subr.bf16.mxu0 0
        %427 = vmatpush1.bf16.msra.mxu0 0
        %428 = vmatprep.subr.bf16.mxu0 0
        %429 = vmatpush1.bf16.msra.mxu0 0
        %430 = vmatprep.mubr.bf16.mxu0 0
        %431 = vmatmul.mubr.bf16.gmra.mrb[0].mxu0 %v396
        %v432 = vpop.f32.mrb[0].mxu0
        %v433 = vadd.f32 0.0, %v432
        %v434 = vpop.f32.mrb[0].mxu0
        %v435 = vpop.f32.mrb[0].mxu0
        %v436 = vadd.f32 0.0, %v435
        %v437 = vpop.f32.mrb[0].mxu0
        %438 = vdwg.mxu0
        %v439 = vpack.c.bf16 %v436, %v433
        %v440 = vlaneseq
        %v441 = vshrl.u32 %v440, 7
        %v442 = vsub.s32 0, %v441
        %v443 = vrot.slane %v281, %v442
        %444 = vmatprep.subr.bf16.mxu0 0
        %445 = vmatpush1.bf16.msra.mxu0 %v439
        %446 = vmatprep.subr.bf16.mxu0 0
        %447 = vmatpush1.bf16.msra.mxu0 0
        %448 = vmatprep.subr.bf16.mxu0 0
        %449 = vmatpush1.bf16.msra.mxu0 0
        %450 = vmatprep.subr.bf16.mxu0 0
        %451 = vmatpush1.bf16.msra.mxu0 0
        %452 = vmatprep.subr.bf16.mxu0 0
        %453 = vmatpush1.bf16.msra.mxu0 0
        %454 = vmatprep.subr.bf16.mxu0 0
        %455 = vmatpush1.bf16.msra.mxu0 0
        %456 = vmatprep.subr.bf16.mxu0 0
        %457 = vmatpush1.bf16.msra.mxu0 0
        %458 = vmatprep.subr.bf16.mxu0 0
        %459 = vmatpush1.bf16.msra.mxu0 0
        %460 = vmatprep.subr.bf16.mxu0 0
        %461 = vmatpush1.bf16.msra.mxu0 0
        %462 = vmatprep.subr.bf16.mxu0 0
        %463 = vmatpush1.bf16.msra.mxu0 0
        %464 = vmatprep.subr.bf16.mxu0 0
        %465 = vmatpush1.bf16.msra.mxu0 0
        %466 = vmatprep.subr.bf16.mxu0 0
        %467 = vmatpush1.bf16.msra.mxu0 0
        %468 = vmatprep.subr.bf16.mxu0 0
        %469 = vmatpush1.bf16.msra.mxu0 0
        %470 = vmatprep.subr.bf16.mxu0 0
        %471 = vmatpush1.bf16.msra.mxu0 0
        %472 = vmatprep.subr.bf16.mxu0 0
        %473 = vmatpush1.bf16.msra.mxu0 0
        %474 = vmatprep.subr.bf16.mxu0 0
        %475 = vmatpush1.bf16.msra.mxu0 0
        %476 = vmatprep.mubr.bf16.mxu0 0
        %477 = vmatmul.mubr.bf16.gmra.mrb[0].mxu0 %v346
        %v478 = vpop.f32.mrb[0].mxu0
        %v479 = vadd.f32 %v443, %v478
        %v480 = vpop.f32.mrb[0].mxu0
        %v481 = vpop.f32.mrb[0].mxu0
        %v482 = vadd.f32 %v443, %v481
        %v483 = vpop.f32.mrb[0].mxu0
        %484 = vdwg.mxu0
        %v485 = vtanh.pop %v479
        %v486 = vtanh.pop %v482
        %v487 = vpack.c.bf16 %v486, %v485
        %488 = vmatprep.subr.bf16.mxu0 0
        %489 = vmatpush1.bf16.msra.mxu0 %v487
        %490 = vmatprep.subr.bf16.mxu0 0
        %491 = vmatpush1.bf16.msra.mxu0 0
        %492 = vmatprep.subr.bf16.mxu0 0
        %493 = vmatpush1.bf16.msra.mxu0 0
        %494 = vmatprep.subr.bf16.mxu0 0
        %495 = vmatpush1.bf16.msra.mxu0 0
        %496 = vmatprep.subr.bf16.mxu0 0
        %497 = vmatpush1.bf16.msra.mxu0 0
        %498 = vmatprep.subr.bf16.mxu0 0
        %499 = vmatpush1.bf16.msra.mxu0 0
        %500 = vmatprep.subr.bf16.mxu0 0
        %501 = vmatpush1.bf16.msra.mxu0 0
        %502 = vmatprep.subr.bf16.mxu0 0
        %503 = vmatpush1.bf16.msra.mxu0 0
        %504 = vmatprep.subr.bf16.mxu0 0
        %505 = vmatpush1.bf16.msra.mxu0 0
        %506 = vmatprep.subr.bf16.mxu0 0
        %507 = vmatpush1.bf16.msra.mxu0 0
        %508 = vmatprep.subr.bf16.mxu0 0
        %509 = vmatpush1.bf16.msra.mxu0 0
        %510 = vmatprep.subr.bf16.mxu0 0
        %511 = vmatpush1.bf16.msra.mxu0 0
        %512 = vmatprep.subr.bf16.mxu0 0
        %513 = vmatpush1.bf16.msra.mxu0 0
        %514 = vmatprep.subr.bf16.mxu0 0
        %515 = vmatpush1.bf16.msra.mxu0 0
        %516 = vmatprep.subr.bf16.mxu0 0
        %517 = vmatpush1.bf16.msra.mxu0 0
        %518 = vmatprep.subr.bf16.mxu0 0
        %519 = vmatpush1.bf16.msra.mxu0 0
        %520 = vmatprep.mubr.bf16.mxu0 0
        %521 = vmatmul.mubr.bf16.gmra.mrb[0].mxu0 %v346
        %v522 = vpop.f32.mrb[0].mxu0
        %v523 = vadd.f32 0.0, %v522
        %v524 = vpop.f32.mrb[0].mxu0
        %v525 = vpop.f32.mrb[0].mxu0
        %v526 = vadd.f32 0.0, %v525
        %v527 = vpop.f32.mrb[0].mxu0
        %528 = vdwg.mxu0
        %v529 = vlaneseq
        %v530 = vshrl.u32 %v529, 7
        %v531 = vsub.s32 0, %v530
        %v532 = vrot.slane %v282, %v531
        %v533 = vmul.f32 %v523, %v532
        %v534 = vmul.f32 %v526, %v532
        %vm535 = vcmask 64512
        %v536 = vsel %vm535, %v533, 0.0
        %537 = vadd.xlane.f32.xlu0 %v536
        %v538 = vpop.xlane.xlu0 %537
        %v539 = vsel %vm535, %v534, 0.0
        %540 = vadd.xlane.f32.xlu0 %v539
        %v541 = vpop.xlane.xlu0 %540
        %v542 = vlaneseq
        %v543 = vshrl.u32 %v542, 7
        %v544 = vsub.s32 0, %v543
        %v545 = vrot.slane %v283, %v544
        %v546 = vadd.f32 %v538, %v545
        %v547 = vadd.f32 %v541, %v545
        %vm548 = vcmask 7168
        %549 = vst.msk [vmem:[%s271] sm:$0xff] %vm548, %v546
        %550 = vst.msk [vmem:[%s271 + $0x8] sm:$0xff] %vm548, %v547
        %p551 = scmp.lt.s32.totalorder %s21, 3
        %s552 = scalar_select %p551, %s21, 3
        %s553 = smul.addr %s552, 2
        %s554 = smul.addr %s553, 8
        %s555 = scalar_lea.vmem %s4, %s554
        // Predicated region
        $region49: #{tpu_custom_call.1} parent=35 // pred_check
          %p556 = pneg %p133
        $region50: #{tpu_custom_call.1} parent=35 // pred_check_branch
          %558 = sbr.rel (%p556) target = $region52
        $region51: #{tpu_custom_call.1} parent=35 // pred_region
          _
        $region52: #{tpu_custom_call.1} parent=35 // pred_fallthru
          _
      $region36: #{tpu_custom_call.1} parent=5 // pred_fallthru
        _
      %p559 = scmp.le.s32.totalorder 2, %s16
      // Predicated region
      $region53: #{tpu_custom_call.1} parent=5 // pred_check
        %p560 = pneg %p559
      $region54: #{tpu_custom_call.1} parent=5 // pred_check_branch
        %562 = sbr.rel (%p560) target = $region56
      $region55: #{tpu_custom_call.1} parent=5 // pred_region
        %s563 = ssub.s32 %s16, 2
        // Predicated region
        $region57: #{tpu_custom_call.1} parent=55 // pred_check
          %p564 = pneg %p139
        $region58: #{tpu_custom_call.1} parent=55 // pred_check_branch
          %566 = sbr.rel (%p564) target = $region60
        $region59: #{tpu_custom_call.1} parent=55 // pred_region
          %p567 = scmp.lt.s32.totalorder %s22, 3
          %s568 = scalar_select %p567, %s22, 3
          %s569 = smul.addr %s568, 2
          %s570 = smul.addr %s569, 8
          %s571 = scalar_lea.vmem %s4, %s570
        $region60: #{tpu_custom_call.1} parent=55 // pred_fallthru
          _
      $region56: #{tpu_custom_call.1} parent=5 // pred_fallthru
        _
    $region6: #{tpu_custom_call.1} parent=1 // loop_footer
      %s20 = sadd.s32 1, %s16
    $region7: #{tpu_custom_call.1} parent=1 // loop_footer_branch
      %15 = sbr.rel target = $region3
    $region8: #{tpu_custom_call.1} parent=1 // loop_exit
      _
    %572 = vsyncpa [#allocation3], 1
    %s573 = scalar_lea.sflag [#allocation3], 1
    %574 = vsyncpa %s573, 1
    %575 = vsyncpa [#allocation5], 1
    %s576 = scalar_lea.sflag [#allocation5], 1
    %577 = vsyncpa %s576, 1

</llo_original>
